<compile_context>
chip_gen: v7x
topology: tpu7x:2x2x1
jax: 0.10.0
libtpu: 0.0.40
codegen_flags: <defaults>
</compile_context>

<pallas_src>
import functools

import jax
import jax.numpy as jnp
from jax import lax
from jax.experimental import pallas as pl
from jax.experimental.pallas import tpu as pltpu


def _round_up(x, m):
    return (x + m - 1) // m * m


def _cdiv(a, b):
    return (a + b - 1) // b


def _vmem_limit_bytes():
    """~3/4 of the chip's VMEM, capped at 96 MiB (=> ~48 MiB on v7x's 64 MiB)."""
    try:
        cap = int(pltpu.get_tpu_info().vmem_capacity_bytes)
    except Exception:  # unknown chip -> conservative (v7x-sized) assumption
        cap = 64 * 1024 * 1024
    return min((cap * 3) // 4, 96 * 1024 * 1024)


# --------------- kernel 1: node stream -> per-graph partial aggregates ---------------
def stream_kernel(batch_ref, x_ref, wenc_ref, benc_ref, part_ref, acc_ref, *,
                  n_valid, tiles_per_split, apply_mask, compute_dtype):
    """Grid = (num_splits [parallel], tiles_per_split [arbitrary / reduction]).

    Nodes-on-lanes layout: x_ref is (input_dim, TN), h is (Hp, TN); the per-graph
    aggregate accumulator acc_ref is (Hp, Gp) and is written to part_ref[split] once
    per split (output block index depends only on the parallel axis).
    """
    f32 = jnp.float32
    c = pl.program_id(0)
    i = pl.program_id(1)

    @pl.when(i == 0)
    def _init():
        acc_ref[...] = jnp.zeros_like(acc_ref)

    # h^T = relu(W_enc^T @ x^T + b_enc): (Hp, TN) in f32.
    h = jnp.dot(wenc_ref[...], x_ref[...], preferred_element_type=f32)
    h = jnp.maximum(h + benc_ref[...], 0.0)

    tn = x_ref.shape[1]
    if apply_mask:
        # Zero tail / overhang columns (global node index >= N) BEFORE the
        # aggregation matmul so OOB garbage cannot propagate.
        col = lax.broadcasted_iota(jnp.int32, (1, tn), 1)
        gcol = col + (c * tiles_per_split + i) * tn
        h = jnp.where(gcol < n_valid, h, 0.0)

    h = h.astype(compute_dtype)

    # Per-graph selection mask built in-kernel: A[g, n] = [batch[n] == g].
    gp = acc_ref.shape[1]
    gids = lax.broadcasted_iota(jnp.int32, (gp, tn), 0)          # (Gp, TN)
    a = (gids == batch_ref[...]).astype(compute_dtype)           # (Gp, TN)

    # (Hp, TN) x (Gp, TN) -> (Hp, Gp); f32 accumulation on the MXU.
    acc_ref[...] += jnp.einsum('hn,gn->hg', h, a, preferred_element_type=f32)

    @pl.when(i == pl.num_programs(1) - 1)
    def _write():
        part_ref[0, :, :] = acc_ref[...]


# --------------- kernel 2: combine partials + virtual-node / prediction MLPs ----------
def finalize_kernel(part_ref, wpack_ref, bpack_ref, out_ref, *,
                    num_virtual_nodes, compute_dtype):
    f32 = jnp.float32
    # Combine the per-split (per-TensorCore) partial aggregates.
    agg = jnp.sum(part_ref[...], axis=0)                         # (Hp, Gp) f32
    # Uniform edge init: each of the V virtual nodes carries the same aggregate
    # (sum / V); the V-fold duplication and the mean pool over virtual nodes collapse.
    v = agg * (1.0 / float(num_virtual_nodes))

    w = wpack_ref[...]          # (4, Hp, Hp): transposed w_v1, w_v2, w_p1, w_p2
    b = bpack_ref[...]          # (Hp, 4) f32: b_v1, b_v2, b_p1, b_p2 as columns

    def lin(z, k):
        return (jnp.dot(w[k], z.astype(compute_dtype),
                        preferred_element_type=f32) + b[:, k:k + 1])

    v1 = jnp.maximum(lin(v, 0), 0.0)     # virtual_node_mlp: Linear + ReLU
    v2 = lin(v1, 1)                      # virtual_node_mlp: Linear
    p1 = jnp.maximum(lin(v2, 2), 0.0)    # pred_mlp: Linear + ReLU
    out_ref[...] = lin(p1, 3)            # pred_mlp: Linear (padded rows/cols stay 0)


# -------------------------------------- wrapper ---------------------------------------
def hybrid_forward(x_t, batch, params, *, num_virtual_nodes, num_graphs,
                   node_tile=4096, compute_dtype=jnp.bfloat16, num_splits=2):
    """Forward pass of SimpleHybridModel (edge_init_type='uniform').

    x_t: node features in lane-dense layout (input_dim, N).  Supplying it already in
    `compute_dtype` avoids the only remaining O(N) wrapper-side op (a dtype cast).
    """
    input_dim, n_nodes = x_t.shape
    hidden = params["w_v1"].shape[0]
    out_dim = params["w_p2"].shape[1]
    g = num_graphs
    f32 = jnp.float32
    cdt = compute_dtype

    assert node_tile % 128 == 0, "node_tile must be a multiple of 128"

    hp = _round_up(max(hidden, out_dim), 8)       # padded feature rows (sublanes)
    gp = _round_up(max(g, 8), 8)                  # padded graph columns (lanes)

    if n_nodes <= node_tile:
        tn = n_nodes                              # single tile == full extent
    else:
        tn = node_tile                            # multiple of 128 -> legal tiling
    num_tiles = _cdiv(n_nodes, tn)
    splits = max(1, min(num_splits, num_tiles))   # parallel partial accumulators
    tps = _cdiv(num_tiles, splits)                # node tiles per split
    needs_mask = (splits * tps * tn != n_nodes)   # tail or overhang blocks exist

    # ---- tiny wrapper-side glue (no O(N) pad copy of x; only the batch-id row) ----
    x_c = x_t.astype(cdt)                         # no-op if caller already passed cdt
    n_pad = num_tiles * tn
    batch_p = jnp.full((1, n_pad), g, jnp.int32).at[0, :n_nodes].set(
        batch.astype(jnp.int32))

    w_enc_t = jnp.zeros((hp, input_dim), cdt).at[:hidden, :].set(
        params["w_enc"].T.astype(cdt))
    b_enc_c = jnp.zeros((hp, 1), f32).at[:hidden, 0].set(params["b_enc"].astype(f32))

    def pad_wt(wm):   # (in, out) -> transposed, zero-padded to (Hp, Hp)
        return jnp.zeros((hp, hp), cdt).at[:wm.shape[1], :wm.shape[0]].set(
            wm.T.astype(cdt))

    wpack = jnp.stack([pad_wt(params["w_v1"]), pad_wt(params["w_v2"]),
                       pad_wt(params["w_p1"]), pad_wt(params["w_p2"])])

    def pad_b(bv):
        return jnp.zeros((hp,), f32).at[:bv.shape[0]].set(bv.astype(f32))

    bpack = jnp.stack([pad_b(params["b_v1"]), pad_b(params["b_v2"]),
                       pad_b(params["b_p1"]), pad_b(params["b_p2"])], axis=1)  # (Hp, 4)

    def node_block(c, i):   # clamp overhang blocks into range; they are masked in-kernel
        return jnp.minimum(c * tps + i, num_tiles - 1)

    stream = functools.partial(stream_kernel, n_valid=n_nodes, tiles_per_split=tps,
                               apply_mask=needs_mask, compute_dtype=cdt)

    partials = pl.pallas_call(
        stream,
        out_shape=jax.ShapeDtypeStruct((splits, hp, gp), f32),
        grid=(splits, tps),
        in_specs=[
            pl.BlockSpec((1, tn), lambda c, i: (0, node_block(c, i))),          # batch ids
            pl.BlockSpec((input_dim, tn), lambda c, i: (0, node_block(c, i))),  # x^T tile
            pl.BlockSpec((hp, input_dim), lambda c, i: (0, 0)),                 # W_enc^T
            pl.BlockSpec((hp, 1), lambda c, i: (0, 0)),                         # b_enc
        ],
        out_specs=pl.BlockSpec((1, hp, gp), lambda c, i: (c, 0, 0)),
        scratch_shapes=[pltpu.VMEM((hp, gp), f32)],                             # accumulator
        compiler_params=pltpu.CompilerParams(
            dimension_semantics=("parallel", "arbitrary"),
            vmem_limit_bytes=_vmem_limit_bytes(),
        ),
    )(batch_p, x_c, w_enc_t, b_enc_c)

    # Tiny finalize: combine per-split partials + 4-layer MLP; all operands fit VMEM.
    fin = functools.partial(finalize_kernel, num_virtual_nodes=num_virtual_nodes,
                            compute_dtype=cdt)
    out_t = pl.pallas_call(
        fin, out_shape=jax.ShapeDtypeStruct((hp, gp), f32),
    )(partials, wpack, bpack)

    return out_t[:out_dim, :g].T                  # (num_graphs, output_dim)


# ------------------------- deterministic parameters -----------------------------------
def init_linear(key, in_dim, out_dim):
    """PyTorch-style uniform(-1/sqrt(fan_in), 1/sqrt(fan_in)), stored as (in, out)."""
    kw, kb = jax.random.split(key)
    bound = 1.0 / (in_dim ** 0.5)
    w = jax.random.uniform(kw, (in_dim, out_dim), jnp.float32, -bound, bound)
    b = jax.random.uniform(kb, (out_dim,), jnp.float32, -bound, bound)
    return w, b


def make_params(key, input_dim, hidden_dim, output_dim):
    keys = jax.random.split(key, 5)
    w_enc, b_enc = init_linear(keys[0], input_dim, hidden_dim)
    w_v1, b_v1 = init_linear(keys[1], hidden_dim, hidden_dim)
    w_v2, b_v2 = init_linear(keys[2], hidden_dim, hidden_dim)
    w_p1, b_p1 = init_linear(keys[3], hidden_dim, hidden_dim)
    w_p2, b_p2 = init_linear(keys[4], hidden_dim, output_dim)
    return dict(w_enc=w_enc, b_enc=b_enc, w_v1=w_v1, b_v1=b_v1,
                w_v2=w_v2, b_v2=b_v2, w_p1=w_p1, b_p1=b_p1,
                w_p2=w_p2, b_p2=b_p2)


# ------------------------------ pure-JAX reference ------------------------------------
def reference_forward(x, batch, params, *, num_virtual_nodes, num_graphs):
    """Direct transcription of the PyTorch forward (uniform edge init)."""
    V, G = num_virtual_nodes, num_graphs
    h = jnp.maximum(x @ params["w_enc"] + params["b_enc"], 0.0)
    virt = []
    for gi in range(G):
        mask = (batch == gi).astype(jnp.float32)[:, None]
        agg = jnp.sum(h * mask, axis=0) / V          # uniform weights 1/V
        for _ in range(V):
            virt.append(agg)
    virt = jnp.stack(virt, axis=0)
    v1 = jnp.maximum(virt @ params["w_v1"] + params["b_v1"], 0.0)
    v2 = v1 @ params["w_v2"] + params["b_v2"]
    gf = v2.reshape(G, V, -1).mean(axis=1)
    p1 = jnp.maximum(gf @ params["w_p1"] + params["b_p1"], 0.0)
    return p1 @ params["w_p2"] + params["b_p2"]


# ----------------------------------------- main ---------------------------------------
if __name__ == "__main__":
    input_dim, hidden_dim, output_dim = 16, 32, 4
    num_virtual_nodes = 4

    key = jax.random.PRNGKey(0)
    k_x, k_p, k_x2 = jax.random.split(key, 3)
    params = make_params(k_p, input_dim, hidden_dim, output_dim)

    # ---- small case: 2 graphs (5 + 7 nodes = 12), single-tile path ----
    batch_sizes = [5, 7]
    num_graphs = len(batch_sizes)
    n = sum(batch_sizes)
    x = jax.random.normal(k_x, (n, input_dim), jnp.float32)
    batch = jnp.concatenate(
        [jnp.full((s,), gi, jnp.int32) for gi, s in enumerate(batch_sizes)])

    ref = reference_forward(x, batch, params,
                            num_virtual_nodes=num_virtual_nodes,
                            num_graphs=num_graphs)

    # f32 path: numerically equivalent to the reference, strict tolerance.
    preds = hybrid_forward(x.T, batch, params,
                           num_virtual_nodes=num_virtual_nodes,
                           num_graphs=num_graphs, compute_dtype=jnp.float32)
    preds = jax.block_until_ready(preds)
    assert preds.shape == (num_graphs, output_dim)
    assert jnp.allclose(preds, ref, atol=1e-5, rtol=1e-5)

    # default bf16-matmul / f32-accumulate path (perf config), loose tolerance.
    preds_bf16 = hybrid_forward(jnp.asarray(x.T, jnp.bfloat16), batch, params,
                                num_virtual_nodes=num_virtual_nodes,
                                num_graphs=num_graphs)
    preds_bf16 = jax.block_until_ready(preds_bf16)
    assert jnp.allclose(preds_bf16, ref, atol=1e-1, rtol=1e-1)

    # ---- larger case: exercises tiling, the 2-way parallel split, index clamping
    #      and the in-kernel tail mask ----
    num_graphs2, n2 = 6, 5000
    x2 = jax.random.normal(k_x2, (n2, input_dim), jnp.float32)
    batch2 = (jnp.arange(n2, dtype=jnp.int32) * num_graphs2 // n2).astype(jnp.int32)
    ref2 = reference_forward(x2, batch2, params,
                             num_virtual_nodes=num_virtual_nodes,
                             num_graphs=num_graphs2)
    preds2 = hybrid_forward(x2.T, batch2, params,
                            num_virtual_nodes=num_virtual_nodes,
                            num_graphs=num_graphs2, node_tile=1024,
                            compute_dtype=jnp.float32)
    preds2 = jax.block_until_ready(preds2)
    assert preds2.shape == (num_graphs2, output_dim)
    assert jnp.allclose(preds2, ref2, atol=2e-2, rtol=2e-3)

    print("KERNEL_OK")
</pallas_src>

<mosaic_0001>
module attributes {stable_mosaic.version = 11 : i64} {
  func.func @stream_kernel(%arg0: i32, %arg1: i32, %arg2: memref<1x12xi32, #tpu.memory_space<vmem>>, %arg3: memref<16x12xf32, #tpu.memory_space<vmem>>, %arg4: memref<32x16xf32, #tpu.memory_space<vmem>>, %arg5: memref<32x1xf32, #tpu.memory_space<vmem>>, %arg6: memref<1x32x8xf32, #tpu.memory_space<vmem>>, %arg7: memref<32x8xf32, #tpu.memory_space<vmem>>) attributes {dimension_semantics = [#tpu.dimension_semantics<parallel>, #tpu.dimension_semantics<arbitrary>], iteration_bounds = array<i64: 1, 1>, scalar_prefetch = 0 : i64, scratch_operands = 1 : i64, tpu.core_type = #tpu.core_type<tc>, window_params = [{transform_indices = @transform_0, window_bounds = array<i64: 1, 12>}, {transform_indices = @transform_1, window_bounds = array<i64: 16, 12>}, {pipeline_mode = #tpu.pipeline_mode<synchronous>, transform_indices = @transform_2, window_bounds = array<i64: 32, 16>}, {pipeline_mode = #tpu.pipeline_mode<synchronous>, transform_indices = @transform_3, window_bounds = array<i64: 32, 1>}, {transform_indices = @transform_4, window_bounds = array<i64: 1, 32, 8>}]} {
    %c0_i32 = arith.constant 0 : i32
    %0 = arith.cmpi eq, %arg1, %c0_i32 : i32
    %1 = arith.extui %0 : i1 to i32
    %c0_i32_0 = arith.constant 0 : i32
    %2 = arith.cmpi ne, %1, %c0_i32_0 : i32
    scf.if %2 {
      %cst_16 = arith.constant 0.000000e+00 : f32
      %24 = vector.broadcast %cst_16 : f32 to vector<32x8xf32>
      %c0_17 = arith.constant 0 : index
      %c0_18 = arith.constant 0 : index
      %25 = vector.load %arg7[%c0_17, %c0_18] : memref<32x8xf32, #tpu.memory_space<vmem>>, vector<32x8xf32>
      tpu.vector_store %arg7[%c0_17, %c0_18], %24 {strides = array<i32>} : memref<32x8xf32, #tpu.memory_space<vmem>>, vector<32x8xf32>,
    } else {
    }
    %c0 = arith.constant 0 : index
    %c0_1 = arith.constant 0 : index
    %3 = vector.load %arg4[%c0, %c0_1] : memref<32x16xf32, #tpu.memory_space<vmem>>, vector<32x16xf32>
    %c0_2 = arith.constant 0 : index
    %c0_3 = arith.constant 0 : index
    %4 = vector.load %arg3[%c0_2, %c0_3] : memref<16x12xf32, #tpu.memory_space<vmem>>, vector<16x12xf32>
    %cst = arith.constant dense<0.000000e+00> : vector<32x12xf32>
    %5 = tpu.matmul %3, %4, %cst {dimension_numbers = #tpu.dot_dimension_numbers<[1], [0], [0], [1], [0, 0, 1, 1], [], []>} : vector<32x16xf32>, vector<16x12xf32>, vector<32x12xf32> -> vector<32x12xf32>
    %c0_4 = arith.constant 0 : index
    %c0_5 = arith.constant 0 : index
    %6 = vector.load %arg5[%c0_4, %c0_5] : memref<32x1xf32, #tpu.memory_space<vmem>>, vector<32x1xf32>
    %7 = vector.broadcast %6 : vector<32x1xf32> to vector<32x12xf32>
    %8 = arith.addf %5, %7 : vector<32x12xf32>
    %cst_6 = arith.constant 0.000000e+00 : f32
    %9 = vector.broadcast %cst_6 : f32 to vector<32x12xf32>
    %10 = arith.maximumf %8, %9 : vector<32x12xf32>
    %11 = tpu.iota {dimensions = array<i32: 0>} : vector<8x12xi32>
    %c0_7 = arith.constant 0 : index
    %c0_8 = arith.constant 0 : index
    %12 = vector.load %arg2[%c0_7, %c0_8] : memref<1x12xi32, #tpu.memory_space<vmem>>, vector<1x12xi32>
    %13 = vector.broadcast %12 : vector<1x12xi32> to vector<8x12xi32>
    %14 = arith.cmpi eq, %11, %13 : vector<8x12xi32>
    %15 = arith.extui %14 : vector<8x12xi1> to vector<8x12xi32>
    %16 = arith.sitofp %15 : vector<8x12xi32> to vector<8x12xf32>
    %c0_9 = arith.constant 0 : index
    %c0_10 = arith.constant 0 : index
    %17 = vector.load %arg7[%c0_9, %c0_10] : memref<32x8xf32, #tpu.memory_space<vmem>>, vector<32x8xf32>
    "tpu.trace_start"() <{level = 10 : i32, message = "hn,gn->hg"}> : () -> ()
    %cst_11 = arith.constant dense<0.000000e+00> : vector<32x8xf32>
    %18 = tpu.matmul %10, %16, %cst_11 {dimension_numbers = #tpu.dot_dimension_numbers<[1], [1], [0], [0], [0, 0, 1, 0], [], []>} : vector<32x12xf32>, vector<8x12xf32>, vector<32x8xf32> -> vector<32x8xf32>
    "tpu.trace_stop"() : () -> ()
    %19 = arith.addf %17, %18 : vector<32x8xf32>
    %c0_12 = arith.constant 0 : index
    %c0_13 = arith.constant 0 : index
    %20 = vector.load %arg7[%c0_12, %c0_13] : memref<32x8xf32, #tpu.memory_space<vmem>>, vector<32x8xf32>
    tpu.vector_store %arg7[%c0_12, %c0_13], %19 {strides = array<i32>} : memref<32x8xf32, #tpu.memory_space<vmem>>, vector<32x8xf32>,
    %c0_i32_14 = arith.constant 0 : i32
    %21 = arith.cmpi eq, %arg1, %c0_i32_14 : i32
    %22 = arith.extui %21 : i1 to i32
    %c0_i32_15 = arith.constant 0 : i32
    %23 = arith.cmpi ne, %22, %c0_i32_15 : i32
    scf.if %23 {
      %c0_16 = arith.constant 0 : index
      %c0_17 = arith.constant 0 : index
      %24 = vector.load %arg7[%c0_16, %c0_17] : memref<32x8xf32, #tpu.memory_space<vmem>>, vector<32x8xf32>
      %c0_18 = arith.constant 0 : index
      %c0_19 = arith.constant 0 : index
      %c0_20 = arith.constant 0 : index
      %25 = vector.load %arg6[%c0_18, %c0_19, %c0_20] : memref<1x32x8xf32, #tpu.memory_space<vmem>>, vector<1x32x8xf32>
      %26 = vector.shape_cast %25 : vector<1x32x8xf32> to vector<32x8xf32>
      %27 = vector.shape_cast %24 : vector<32x8xf32> to vector<1x32x8xf32>
      tpu.vector_store %arg6[%c0_18, %c0_19, %c0_20], %27 {strides = array<i32>} : memref<1x32x8xf32, #tpu.memory_space<vmem>>, vector<1x32x8xf32>,
    } else {
    }
    return
  }
  func.func @transform_0(%arg0: i32, %arg1: i32) -> (i32, i32) {
    %c1_i32 = arith.constant 1 : i32
    %0 = arith.muli %arg0, %c1_i32 : i32
    %1 = arith.addi %0, %arg1 : i32
    %c0_i32 = arith.constant 0 : i32
    %2 = arith.minsi %1, %c0_i32 : i32
    %c0_i32_0 = arith.constant 0 : i32
    %c0_i32_1 = arith.constant 0 : i32
    return %c0_i32_0, %2 : i32, i32
  }
  func.func @transform_1(%arg0: i32, %arg1: i32) -> (i32, i32) {
    %c1_i32 = arith.constant 1 : i32
    %0 = arith.muli %arg0, %c1_i32 : i32
    %1 = arith.addi %0, %arg1 : i32
    %c0_i32 = arith.constant 0 : i32
    %2 = arith.minsi %1, %c0_i32 : i32
    %c0_i32_0 = arith.constant 0 : i32
    %c0_i32_1 = arith.constant 0 : i32
    return %c0_i32_0, %2 : i32, i32
  }
  func.func @transform_2(%arg0: i32, %arg1: i32) -> (i32, i32) {
    %c0_i32 = arith.constant 0 : i32
    %c0_i32_0 = arith.constant 0 : i32
    %c0_i32_1 = arith.constant 0 : i32
    return %c0_i32, %c0_i32_0 : i32, i32
  }
  func.func @transform_3(%arg0: i32, %arg1: i32) -> (i32, i32) {
    %c0_i32 = arith.constant 0 : i32
    %c0_i32_0 = arith.constant 0 : i32
    %c0_i32_1 = arith.constant 0 : i32
    return %c0_i32, %c0_i32_0 : i32, i32
  }
  func.func @transform_4(%arg0: i32, %arg1: i32) -> (i32, i32, i32) {
    %c0_i32 = arith.constant 0 : i32
    %c0_i32_0 = arith.constant 0 : i32
    %c0_i32_1 = arith.constant 0 : i32
    return %arg0, %c0_i32, %c0_i32_0 : i32, i32, i32
  }
}

</mosaic_0001>

<llo_original>
// kernel: tpu_custom_call.1
$region0: #{tpu_custom_call.1}
  #allocation0 [shape = 'u32[]', space=smem, size = 0x4, offset = 0x4, fixed_abs, tag = 'smem constant byte address 0x4 - core index']
  #allocation1 [shape = 'u32[144,128]{1,0:T(1,128)}', space=vmem, size = 0x12000, scoped, tag = 'internal scratch']
  #allocation2 [shape = 'f32[32,8]{1,0:T(8,128)}', space=vmem, size = 0x4000, scoped, tag = 'scratch operand']
  %s0 = inlined_call_operand.vmem [shape: s32[1,12], index: 0, kind: input, shape index: {}]
  %s1 = inlined_call_operand.vmem [shape: f32[16,12], index: 1, kind: input, shape index: {}]
  %s2 = inlined_call_operand.vmem [shape: f32[32,16], index: 2, kind: input, shape index: {}]
  %s3 = inlined_call_operand.vmem [shape: f32[32,1], index: 3, kind: input, shape index: {}]
  %s4 = inlined_call_operand.vmem [shape: f32[1,32,8], index: 4, kind: output, shape index: {}]
  %s5 = sld [smem:[#allocation0]]
  $region34: #{tpu_custom_call.1} parent=0
    _
  %s7 = ssub.s32 1, %s5
  %s8 = scalar_select 0, %s7, %s5
  // Predicated region
  $region2: #{tpu_custom_call.1} parent=0 // pred_check
    _
  $region3: #{tpu_custom_call.1} parent=0 // pred_check_branch
    %10 = sbr.rel (0) target = $region5
  $region4: #{tpu_custom_call.1} parent=0 // pred_region
    %s11 = sadd.s32 0, 0
    %p12 = scmp.lt.s32.totalorder %s11, 0
    %s13 = scalar_select %p12, %s11, 0
    %p14 = scmp.lt.s32.totalorder %s13, 0
    %s15 = scalar_select %p14, %s13, 0
    %s16 = scalar_lea.vmem %s0, %s15
    %s17 = sadd.s32 0, 0
    %p18 = scmp.lt.s32.totalorder %s17, 0
    %s19 = scalar_select %p18, %s17, 0
  $region5: #{tpu_custom_call.1} parent=0 // pred_fallthru
    _
  // Predicated region
  $region6: #{tpu_custom_call.1} parent=0 // pred_check
    _
  $region7: #{tpu_custom_call.1} parent=0 // pred_check_branch
    %21 = sbr.rel (0) target = $region9
  $region8: #{tpu_custom_call.1} parent=0 // pred_region
    %s22 = sadd.s32 0, 0
    %p23 = scmp.lt.s32.totalorder %s22, 0
    %s24 = scalar_select %p23, %s22, 0
    %p25 = scmp.lt.s32.totalorder %s24, 0
    %s26 = scalar_select %p25, %s24, 0
    %s27 = smul.addr %s26, 8
    %s28 = scalar_lea.vmem %s1, %s27
    %s29 = sadd.s32 0, 0
    %p30 = scmp.lt.s32.totalorder %s29, 0
    %s31 = scalar_select %p30, %s29, 0
  $region9: #{tpu_custom_call.1} parent=0 // pred_fallthru
    _
  // Predicated region
  $region10: #{tpu_custom_call.1} parent=0 // pred_check
    _
  $region11: #{tpu_custom_call.1} parent=0 // pred_check_branch
    %33 = sbr.rel (0) target = $region13
  $region12: #{tpu_custom_call.1} parent=0 // pred_region
    _
  $region13: #{tpu_custom_call.1} parent=0 // pred_fallthru
    _
  // Predicated region
  $region14: #{tpu_custom_call.1} parent=0 // pred_check
    _
  $region15: #{tpu_custom_call.1} parent=0 // pred_check_branch
    %35 = sbr.rel (0) target = $region17
  $region16: #{tpu_custom_call.1} parent=0 // pred_region
    _
  $region17: #{tpu_custom_call.1} parent=0 // pred_fallthru
    _
  %s36 = sadd.s32 0, 0
  %p37 = scmp.lt.s32.totalorder %s36, 0
  %s38 = scalar_select %p37, %s36, 0
  %p39 = scmp.lt.s32.totalorder %s38, 0
  %s40 = scalar_select %p39, %s38, 0
  %s41 = scalar_lea.vmem %s0, %s40
  %s42 = sadd.s32 0, 0
  %p43 = scmp.lt.s32.totalorder %s42, 0
  %s44 = scalar_select %p43, %s42, 0
  %p45 = scmp.lt.s32.totalorder %s44, 0
  %s46 = scalar_select %p45, %s44, 0
  %s47 = smul.addr %s46, 8
  %s48 = scalar_lea.vmem %s1, %s47
  %s49 = sadd.s32 0, 0
  %p50 = scmp.lt.s32.totalorder %s49, 0
  %s51 = scalar_select %p50, %s49, 0
  %p52 = scmp.lt.s32.totalorder %s51, 0
  %s53 = scalar_select %p52, %s51, 0
  %s54 = scalar_lea.vmem %s0, %s53
  %s55 = sadd.s32 0, 0
  %p56 = scmp.lt.s32.totalorder %s55, 0
  %s57 = scalar_select %p56, %s55, 0
  %s58 = sadd.s32 0, 0
  %p59 = scmp.lt.s32.totalorder %s58, 0
  %s60 = scalar_select %p59, %s58, 0
  %p61 = scmp.lt.s32.totalorder %s60, 0
  %s62 = scalar_select %p61, %s60, 0
  %s63 = smul.addr %s62, 8
  %s64 = scalar_lea.vmem %s1, %s63
  %s65 = sadd.s32 0, 0
  %p66 = scmp.lt.s32.totalorder %s65, 0
  %s67 = scalar_select %p66, %s65, 0
  %p68 = scmp.eq.s32.totalorder 0, 0
  // Predicated region
  $region18: #{tpu_custom_call.1} parent=0 // pred_check
    %p69 = pneg %p68
  $region19: #{tpu_custom_call.1} parent=0 // pred_check_branch
    %71 = sbr.rel (%p69) target = $region21
  $region20: #{tpu_custom_call.1} parent=0 // pred_region
    %vm72 = vcmask 64512
    %73 = vst.msk [vmem:[#allocation2] sm:$0xff] %vm72, 0.0
    %74 = vst.msk [vmem:[#allocation2 + $0x8] sm:$0xff] %vm72, 0.0
    %75 = vst.msk [vmem:[#allocation2 + $0x10] sm:$0xff] %vm72, 0.0
    %76 = vst.msk [vmem:[#allocation2 + $0x18] sm:$0xff] %vm72, 0.0
  $region21: #{tpu_custom_call.1} parent=0 // pred_fallthru
    _
  %v77 = vld [vmem:[%s2] sm:$0xff]
  %v78 = vld [vmem:[%s2 + $0x8] sm:$0xff]
  %v79 = vld [vmem:[%s2 + $0x10] sm:$0xff]
  %v80 = vld [vmem:[%s2 + $0x18] sm:$0xff]
  %v81 = vld [vmem:[%s64] sm:$0xff]
  %v82 = vld [vmem:[%s64 + $0x8] sm:$0xff]
  %v83 = vld [vmem:[%s3] sm:$0xff]
  %v84 = vld [vmem:[%s3 + $0x8] sm:$0xff]
  %v85 = vld [vmem:[%s3 + $0x10] sm:$0xff]
  %v86 = vld [vmem:[%s3 + $0x18] sm:$0xff]
  %88 = vset.pattern.permute.xlu0 0
  %89 = vperm.xlu0 %88, %v83
  %v90 = vpop.permute.xlu0 %89
  %93 = vset.pattern.permute.xlu0 0
  %94 = vperm.xlu0 %93, %v84
  %v95 = vpop.permute.xlu0 %94
  %98 = vset.pattern.permute.xlu0 0
  %99 = vperm.xlu0 %98, %v85
  %v100 = vpop.permute.xlu0 %99
  %103 = vset.pattern.permute.xlu0 0
  %104 = vperm.xlu0 %103, %v86
  %v105 = vpop.permute.xlu0 %104
  %vm107 = vcmask 130048
  %v109 = vsel %vm107, %v77, 0
  %v112 = vsel %vm107, %v78, 0
  %v115 = vsel %vm107, %v79, 0
  %v118 = vsel %vm107, %v80, 0
  %120 = vmatprep.subr.mxu0 0.0
  %121 = vmatpush1.msra.mxu0 %v81
  %122 = vmatprep.subr.mxu0 0.0
  %123 = vmatpush1.msra.mxu0 %v82
  %124 = vmatprep.subr.mxu0 0.0
  %125 = vmatpush1.msra.mxu0 0.0
  %126 = vmatprep.subr.mxu0 0.0
  %127 = vmatpush1.msra.mxu0 0.0
  %128 = vmatprep.subr.mxu0 0.0
  %129 = vmatpush1.msra.mxu0 0.0
  %130 = vmatprep.subr.mxu0 0.0
  %131 = vmatpush1.msra.mxu0 0.0
  %132 = vmatprep.subr.mxu0 0.0
  %133 = vmatpush1.msra.mxu0 0.0
  %134 = vmatprep.subr.mxu0 0.0
  %135 = vmatpush1.msra.mxu0 0.0
  %136 = vmatprep.subr.mxu0 0.0
  %137 = vmatpush1.msra.mxu0 0.0
  %138 = vmatprep.subr.mxu0 0.0
  %139 = vmatpush1.msra.mxu0 0.0
  %140 = vmatprep.subr.mxu0 0.0
  %141 = vmatpush1.msra.mxu0 0.0
  %142 = vmatprep.subr.mxu0 0.0
  %143 = vmatpush1.msra.mxu0 0.0
  %144 = vmatprep.subr.mxu0 0.0
  %145 = vmatpush1.msra.mxu0 0.0
  %146 = vmatprep.subr.mxu0 0.0
  %147 = vmatpush1.msra.mxu0 0.0
  %148 = vmatprep.subr.mxu0 0.0
  %149 = vmatpush1.msra.mxu0 0.0
  %150 = vmatprep.subr.mxu0 0.0
  %151 = vmatpush1.msra.mxu0 0.0
  %152 = vmatprep.subr.mxu0 0.0
  %153 = vmatpush1.msra.mxu0 0.0
  %154 = vmatprep.subr.mxu0 0.0
  %155 = vmatpush1.msra.mxu0 0.0
  %156 = vmatprep.subr.mxu0 0.0
  %157 = vmatpush1.msra.mxu0 0.0
  %158 = vmatprep.subr.mxu0 0.0
  %159 = vmatpush1.msra.mxu0 0.0
  %160 = vmatprep.subr.mxu0 0.0
  %161 = vmatpush1.msra.mxu0 0.0
  %162 = vmatprep.subr.mxu0 0.0
  %163 = vmatpush1.msra.mxu0 0.0
  %164 = vmatprep.subr.mxu0 0.0
  %165 = vmatpush1.msra.mxu0 0.0
  %166 = vmatprep.subr.mxu0 0.0
  %167 = vmatpush1.msra.mxu0 0.0
  %168 = vmatprep.subr.mxu0 0.0
  %169 = vmatpush1.msra.mxu0 0.0
  %170 = vmatprep.subr.mxu0 0.0
  %171 = vmatpush1.msra.mxu0 0.0
  %172 = vmatprep.subr.mxu0 0.0
  %173 = vmatpush1.msra.mxu0 0.0
  %174 = vmatprep.subr.mxu0 0.0
  %175 = vmatpush1.msra.mxu0 0.0
  %176 = vmatprep.subr.mxu0 0.0
  %177 = vmatpush1.msra.mxu0 0.0
  %178 = vmatprep.subr.mxu0 0.0
  %179 = vmatpush1.msra.mxu0 0.0
  %180 = vmatprep.subr.mxu0 0.0
  %181 = vmatpush1.msra.mxu0 0.0
  %182 = vmatprep.subr.mxu0 0.0
  %183 = vmatpush1.msra.mxu0 0.0
  %184 = vmatprep.mubr.f32.mxu0 0.0
  %185 = vmatmul.mubr.f32.gmra.mrb[0].mxu0 %v109
  %v186 = vpop.f32.mrb[0].mxu0
  %v187 = vadd.f32 %v90, %v186
  %v188 = vpop.f32.mrb[0].mxu0
  %189 = vmatprep.mubr.f32.mxu0 0.0
  %190 = vmatmul.mubr.f32.gmra.mrb[0].mxu0 %v112
  %v191 = vpop.f32.mrb[0].mxu0
  %v192 = vadd.f32 %v95, %v191
  %v193 = vpop.f32.mrb[0].mxu0
  %194 = vmatprep.mubr.f32.mxu0 0.0
  %195 = vmatmul.mubr.f32.gmra.mrb[0].mxu0 %v115
  %v196 = vpop.f32.mrb[0].mxu0
  %v197 = vadd.f32 %v100, %v196
  %v198 = vpop.f32.mrb[0].mxu0
  %199 = vmatprep.mubr.f32.mxu0 0.0
  %200 = vmatmul.mubr.f32.gmra.mrb[0].mxu0 %v118
  %v201 = vpop.f32.mrb[0].mxu0
  %v202 = vadd.f32 %v105, %v201
  %v203 = vpop.f32.mrb[0].mxu0
  %204 = vdwg.mxu0
  %v205 = vmax.f32 %v187, 0.0
  %v206 = vmax.f32 %v192, 0.0
  %v207 = vmax.f32 %v197, 0.0
  %v208 = vmax.f32 %v202, 0.0
  %v209 = vlaneseq
  %v210 = vshrl.u32 %v209, 7
  %v211 = vld [vmem:[%s54] sm:$0x1]
  %v212 = vlaneseq
  %v213 = vshrl.u32 %v212, 7
  %v214 = vsub.s32 0, %v213
  %v215 = vrot.slane %v211, %v214
  %vm216 = vcmp.eq.s32.totalorder %v210, %v215
  %v217 = vsel %vm216, 1, 0
  %v218 = vcvt.s32.f32 %v217
  %v219 = vld [vmem:[#allocation2] sm:$0xff]
  %v220 = vld [vmem:[#allocation2 + $0x8] sm:$0xff]
  %v221 = vld [vmem:[#allocation2 + $0x10] sm:$0xff]
  %v222 = vld [vmem:[#allocation2 + $0x18] sm:$0xff]
  %vm223 = vcmask 97280
  %v225 = vsel %vm223, %v205, 0
  %v228 = vsel %vm223, %v206, 0
  %v231 = vsel %vm223, %v207, 0
  %v234 = vsel %vm223, %v208, 0
  %v237 = vsel %vm223, %v218, 0
  %239 = vmatprep.subr.mxu0 0.0
  %240 = vmatpush1.xpose.msra.mxu0 %v237
  %241 = vmatprep.subr.mxu0 0.0
  %242 = vmatpush1.xpose.msra.mxu0 0.0
  %243 = vmatprep.subr.mxu0 0.0
  %244 = vmatpush1.xpose.msra.mxu0 0.0
  %245 = vmatprep.subr.mxu0 0.0
  %246 = vmatpush1.xpose.msra.mxu0 0.0
  %247 = vmatprep.subr.mxu0 0.0
  %248 = vmatpush1.xpose.msra.mxu0 0.0
  %249 = vmatprep.subr.mxu0 0.0
  %250 = vmatpush1.xpose.msra.mxu0 0.0
  %251 = vmatprep.subr.mxu0 0.0
  %252 = vmatpush1.xpose.msra.mxu0 0.0
  %253 = vmatprep.subr.mxu0 0.0
  %254 = vmatpush1.xpose.msra.mxu0 0.0
  %255 = vmatprep.subr.mxu0 0.0
  %256 = vmatpush1.xpose.msra.mxu0 0.0
  %257 = vmatprep.subr.mxu0 0.0
  %258 = vmatpush1.xpose.msra.mxu0 0.0
  %259 = vmatprep.subr.mxu0 0.0
  %260 = vmatpush1.xpose.msra.mxu0 0.0
  %261 = vmatprep.subr.mxu0 0.0
  %262 = vmatpush1.xpose.msra.mxu0 0.0
  %263 = vmatprep.subr.mxu0 0.0
  %264 = vmatpush1.xpose.msra.mxu0 0.0
  %265 = vmatprep.subr.mxu0 0.0
  %266 = vmatpush1.xpose.msra.mxu0 0.0
  %267 = vmatprep.subr.mxu0 0.0
  %268 = vmatpush1.xpose.msra.mxu0 0.0
  %269 = vmatprep.subr.mxu0 0.0
  %270 = vmatpush1.xpose.msra.mxu0 0.0
  %271 = vmatprep.subr.mxu0 0.0
  %272 = vmatpush1.xpose.msra.mxu0 0.0
  %273 = vmatprep.subr.mxu0 0.0
  %274 = vmatpush1.xpose.msra.mxu0 0.0
  %275 = vmatprep.subr.mxu0 0.0
  %276 = vmatpush1.xpose.msra.mxu0 0.0
  %277 = vmatprep.subr.mxu0 0.0
  %278 = vmatpush1.xpose.msra.mxu0 0.0
  %279 = vmatprep.subr.mxu0 0.0
  %280 = vmatpush1.xpose.msra.mxu0 0.0
  %281 = vmatprep.subr.mxu0 0.0
  %282 = vmatpush1.xpose.msra.mxu0 0.0
  %283 = vmatprep.subr.mxu0 0.0
  %284 = vmatpush1.xpose.msra.mxu0 0.0
  %285 = vmatprep.subr.mxu0 0.0
  %286 = vmatpush1.xpose.msra.mxu0 0.0
  %287 = vmatprep.subr.mxu0 0.0
  %288 = vmatpush1.xpose.msra.mxu0 0.0
  %289 = vmatprep.subr.mxu0 0.0
  %290 = vmatpush1.xpose.msra.mxu0 0.0
  %291 = vmatprep.subr.mxu0 0.0
  %292 = vmatpush1.xpose.msra.mxu0 0.0
  %293 = vmatprep.subr.mxu0 0.0
  %294 = vmatpush1.xpose.msra.mxu0 0.0
  %295 = vmatprep.subr.mxu0 0.0
  %296 = vmatpush1.xpose.msra.mxu0 0.0
  %297 = vmatprep.subr.mxu0 0.0
  %298 = vmatpush1.xpose.msra.mxu0 0.0
  %299 = vmatprep.subr.mxu0 0.0
  %300 = vmatpush1.xpose.msra.mxu0 0.0
  %301 = vmatprep.subr.mxu0 0.0
  %302 = vmatpush1.xpose.msra.mxu0 0.0
  %303 = vmatprep.mubr.f32.mxu0 0.0
  %304 = vmatmul.mubr.f32.gmra.mrb[0].mxu0 %v225
  %v305 = vpop.f32.mrb[0].mxu0
  %v306 = vadd.f32 0.0, %v305
  %v307 = vpop.f32.mrb[0].mxu0
  %308 = vmatprep.mubr.f32.mxu0 0.0
  %309 = vmatmul.mubr.f32.gmra.mrb[0].mxu0 %v228
  %v310 = vpop.f32.mrb[0].mxu0
  %v311 = vadd.f32 0.0, %v310
  %v312 = vpop.f32.mrb[0].mxu0
  %313 = vmatprep.mubr.f32.mxu0 0.0
  %314 = vmatmul.mubr.f32.gmra.mrb[0].mxu0 %v231
  %v315 = vpop.f32.mrb[0].mxu0
  %v316 = vadd.f32 0.0, %v315
  %v317 = vpop.f32.mrb[0].mxu0
  %318 = vmatprep.mubr.f32.mxu0 0.0
  %319 = vmatmul.mubr.f32.gmra.mrb[0].mxu0 %v234
  %v320 = vpop.f32.mrb[0].mxu0
  %v321 = vadd.f32 0.0, %v320
  %v322 = vpop.f32.mrb[0].mxu0
  %323 = vdwg.mxu0
  %v324 = vadd.f32 %v219, %v306
  %v325 = vadd.f32 %v220, %v311
  %v326 = vadd.f32 %v221, %v316
  %v327 = vadd.f32 %v222, %v321
  %vm328 = vcmask 64512
  %329 = vst.msk [vmem:[#allocation2] sm:$0xff] %vm328, %v324
  %330 = vst.msk [vmem:[#allocation2 + $0x8] sm:$0xff] %vm328, %v325
  %331 = vst.msk [vmem:[#allocation2 + $0x10] sm:$0xff] %vm328, %v326
  %332 = vst.msk [vmem:[#allocation2 + $0x18] sm:$0xff] %vm328, %v327
  // Predicated region
  $region22: #{tpu_custom_call.1} parent=0 // pred_check
    %p333 = pneg %p68
  $region23: #{tpu_custom_call.1} parent=0 // pred_check_branch
    %335 = sbr.rel (%p333) target = $region25
  $region24: #{tpu_custom_call.1} parent=0 // pred_region
    %v336 = vld [vmem:[#allocation2] sm:$0xff]
    %v337 = vld [vmem:[#allocation2 + $0x8] sm:$0xff]
    %v338 = vld [vmem:[#allocation2 + $0x10] sm:$0xff]
    %v339 = vld [vmem:[#allocation2 + $0x18] sm:$0xff]
    %340 = vst.msk [vmem:[%s4] sm:$0xff] %vm328, %v336
    %341 = vst.msk [vmem:[%s4 + $0x8] sm:$0xff] %vm328, %v337
    %342 = vst.msk [vmem:[%s4 + $0x10] sm:$0xff] %vm328, %v338
    %343 = vst.msk [vmem:[%s4 + $0x18] sm:$0xff] %vm328, %v339
  $region25: #{tpu_custom_call.1} parent=0 // pred_fallthru
    _
  // Predicated region
  $region26: #{tpu_custom_call.1} parent=0 // pred_check
    _
  $region27: #{tpu_custom_call.1} parent=0 // pred_check_branch
    %345 = sbr.rel (0) target = $region29
  $region28: #{tpu_custom_call.1} parent=0 // pred_region
    _
  $region29: #{tpu_custom_call.1} parent=0 // pred_fallthru
    _
  // Predicated region
  $region30: #{tpu_custom_call.1} parent=0 // pred_check
    _
  $region31: #{tpu_custom_call.1} parent=0 // pred_check_branch
    %347 = sbr.rel (0) target = $region33
  $region32: #{tpu_custom_call.1} parent=0 // pred_region
    _
  $region33: #{tpu_custom_call.1} parent=0 // pred_fallthru
    _

</llo_original>
